<compile_context>
chip_gen: v6e
topology: v6e:2x2x1
jax: 0.10.0
libtpu: 0.0.40
codegen_flags: <defaults>
</compile_context>

<pallas_src>
import functools

import jax
import jax.numpy as jnp
from jax.experimental import pallas as pl
from jax.experimental.pallas import tpu as pltpu


def se_block_kernel(x_ref, w1t_ref, b1_ref, w2t_ref, b2_ref, o_ref, *, inv_l):
    # x_ref / o_ref: (Bt, C, Lp) VMEM-resident tile (Lp = L padded to 128).
    # Squeeze: mean over L, accumulated in f32.  Zero padding adds 0 to the sum
    # and inv_l = 1 / true_L, so the mean is exact.
    y = jnp.sum(x_ref[...], axis=-1, dtype=jnp.float32) * inv_l          # (Bt, C)

    # Excitation: dense, lane-dense batched matmuls (one MXU issue each).
    h = jnp.dot(y, w1t_ref[...], preferred_element_type=jnp.float32)     # (Bt, H)
    h = jnp.maximum(h + b1_ref[...], 0.0)
    s = jnp.dot(h, w2t_ref[...], preferred_element_type=jnp.float32)     # (Bt, C)
    gate = jax.nn.sigmoid(s + b2_ref[...]).astype(o_ref.dtype)           # (Bt, C)

    # Scale: re-read x from the VMEM block (do not hold it live across the
    # excitation); one multiply per element, gate broadcast over L.
    o_ref[...] = (x_ref[...] * gate[:, :, None]).astype(o_ref.dtype)


def _pick_batch_tile(batch, row_bytes, *, target_bytes=4 << 20,
                     max_tile_bytes=12 << 20):
    """Rows per grid step: ~target_bytes tile, tile <= max_tile_bytes, grid >= 2."""
    bt = max(1, min(batch, max_tile_bytes // max(row_bytes, 1)))
    bt = min(bt, max(1, target_bytes // max(row_bytes, 1)))
    if batch >= 2:
        bt = min(bt, batch // 2)      # keep >= 2 grid steps (v7x has 2 TCs)
    bt = max(bt, 1)
    while batch % bt != 0:            # must evenly divide the batch
        bt -= 1
    return bt


def se_block(x, w1, b1, w2, b2):
    """SE block forward.

    x : (B, C, L)
    w1: (H, C)  fc1.weight (PyTorch (out, in)),  b1: (H,)
    w2: (C, H)  fc2.weight (PyTorch (out, in)),  b2: (C,)
    """
    B, C, L = x.shape
    H = w1.shape[0]
    itemsize = jnp.dtype(x.dtype).itemsize

    # Lane-dense last dim: pad L up to a multiple of 128 (exact: zero padding
    # contributes nothing to the sum and the mean divides by the true L).
    Lp = ((L + 127) // 128) * 128
    x_p = x if Lp == L else jnp.pad(x, ((0, 0), (0, 0), (0, Lp - L)))

    # Weights transposed once in the wrapper -> plain lane-dense matmuls
    # in-kernel; biases as (1, H) / (1, C) rows (no (.,1) column tiles).
    w1t = jnp.transpose(w1)          # (C, H)
    w2t = jnp.transpose(w2)          # (H, C)
    b1r = jnp.reshape(b1, (1, H))
    b2r = jnp.reshape(b2, (1, C))

    row_bytes = C * Lp * itemsize
    Bt = _pick_batch_tile(B, row_bytes)
    tile_bytes = Bt * row_bytes
    param_bytes = int((w1t.size + b1r.size + w2t.size + b2r.size)
                      * jnp.dtype(w1.dtype).itemsize)

    # in + out tiles, double-buffered, plus resident params and slack; clamp to
    # the physical VMEM of this chip (64 MiB/TC on v7x, 128 MiB on v5e/v6e).
    try:
        vmem_cap = int(getattr(pltpu.get_tpu_info(), "vmem_capacity_bytes",
                               64 << 20))
    except Exception:
        vmem_cap = 64 << 20
    vmem_limit = 4 * tile_bytes + 2 * param_bytes + (2 << 20)
    vmem_limit = int(min(max(vmem_limit, 16 << 20), vmem_cap - (8 << 20)))

    cost = pl.CostEstimate(
        flops=2 * B * C * L + 4 * B * C * H,           # mean + scale + 2 matmuls
        transcendentals=B * C,                         # sigmoid
        bytes_accessed=2 * B * C * Lp * itemsize + param_bytes,
    )

    grid_spec = pltpu.PrefetchScalarGridSpec(
        num_scalar_prefetch=0,
        grid=(B // Bt,),
        in_specs=[
            pl.BlockSpec((Bt, C, Lp), lambda b: (b, 0, 0)),  # x: Bt rows / step
            pl.BlockSpec((C, H), lambda b: (0, 0)),          # w1^T (resident)
            pl.BlockSpec((1, H), lambda b: (0, 0)),          # b1 row
            pl.BlockSpec((H, C), lambda b: (0, 0)),          # w2^T (resident)
            pl.BlockSpec((1, C), lambda b: (0, 0)),          # b2 row
        ],
        out_specs=pl.BlockSpec((Bt, C, Lp), lambda b: (b, 0, 0)),
    )

    out = pl.pallas_call(
        functools.partial(se_block_kernel, inv_l=1.0 / L),
        out_shape=jax.ShapeDtypeStruct((B, C, Lp), x.dtype),
        grid_spec=grid_spec,
        compiler_params=pltpu.CompilerParams(
            dimension_semantics=("parallel",),   # batch blocks across v7x TCs
            vmem_limit_bytes=vmem_limit,
        ),
        cost_estimate=cost,
    )(x_p, w1t, b1r, w2t, b2r)

    return out if Lp == L else out[..., :L]


def se_block_ref(x, w1, b1, w2, b2):
    """Pure-JAX reference matching the PyTorch module (weights in (out, in))."""
    y = jnp.mean(x, axis=-1)                              # (B, C)
    h = jnp.maximum(y @ w1.T + b1, 0.0)                   # (B, H)
    s = jax.nn.sigmoid(h @ w2.T + b2)                     # (B, C)
    return x * s[:, :, None]


if __name__ == "__main__":
    # Small shapes consistent with the module: channels divisible by
    # reduction=16, L a multiple of 128, B large enough for >= 2 grid steps.
    B, C, L = 8, 64, 128
    reduction = 16
    H = C // reduction  # 4

    key = jax.random.PRNGKey(0)
    kx, k1, k2, k3, k4 = jax.random.split(key, 5)

    x = jax.random.normal(kx, (B, C, L), dtype=jnp.float32)

    # Deterministic synthetic parameters in PyTorch (out, in) orientation.
    w1 = jax.random.normal(k1, (H, C), dtype=jnp.float32) * 0.1
    b1 = jax.random.normal(k2, (H,), dtype=jnp.float32) * 0.1
    w2 = jax.random.normal(k3, (C, H), dtype=jnp.float32) * 0.1
    b2 = jax.random.normal(k4, (C,), dtype=jnp.float32) * 0.1

    out = jax.block_until_ready(se_block(x, w1, b1, w2, b2))

    ref = se_block_ref(x, w1, b1, w2, b2)
    assert out.shape == (B, C, L)
    assert jnp.allclose(out, ref, atol=1e-5, rtol=1e-5), "mismatch vs reference"

    print("KERNEL_OK")
</pallas_src>

<mosaic_0001>
module attributes {stable_mosaic.version = 11 : i64} {
  func.func @se_block_kernel(%arg0: i32, %arg1: memref<4x64x128xf32, #tpu.memory_space<vmem>>, %arg2: memref<64x4xf32, #tpu.memory_space<vmem>>, %arg3: memref<1x4xf32, #tpu.memory_space<vmem>>, %arg4: memref<4x64xf32, #tpu.memory_space<vmem>>, %arg5: memref<1x64xf32, #tpu.memory_space<vmem>>, %arg6: memref<4x64x128xf32, #tpu.memory_space<vmem>>) attributes {dimension_semantics = [#tpu.dimension_semantics<parallel>], iteration_bounds = array<i64: 2>, scalar_prefetch = 0 : i64, scratch_operands = 0 : i64, tpu.core_type = #tpu.core_type<tc>, window_params = [{transform_indices = @transform_0, window_bounds = array<i64: 4, 64, 128>}, {pipeline_mode = #tpu.pipeline_mode<synchronous>, transform_indices = @transform_1, window_bounds = array<i64: 64, 4>}, {pipeline_mode = #tpu.pipeline_mode<synchronous>, transform_indices = @transform_2, window_bounds = array<i64: 1, 4>}, {pipeline_mode = #tpu.pipeline_mode<synchronous>, transform_indices = @transform_3, window_bounds = array<i64: 4, 64>}, {pipeline_mode = #tpu.pipeline_mode<synchronous>, transform_indices = @transform_4, window_bounds = array<i64: 1, 64>}, {transform_indices = @transform_5, window_bounds = array<i64: 4, 64, 128>}]} {
    %c0 = arith.constant 0 : index
    %c0_0 = arith.constant 0 : index
    %c0_1 = arith.constant 0 : index
    %0 = vector.load %arg1[%c0, %c0_0, %c0_1] : memref<4x64x128xf32, #tpu.memory_space<vmem>>, vector<4x64x128xf32>
    %cst = arith.constant dense<0.000000e+00> : vector<4x64xf32>
    %1 = vector.multi_reduction <add>, %0, %cst [2] : vector<4x64x128xf32> to vector<4x64xf32>
    %cst_2 = arith.constant 7.812500e-03 : f32
    %2 = vector.broadcast %cst_2 : f32 to vector<4x64xf32>
    %3 = arith.mulf %1, %2 : vector<4x64xf32>
    %c0_3 = arith.constant 0 : index
    %c0_4 = arith.constant 0 : index
    %4 = vector.load %arg2[%c0_3, %c0_4] : memref<64x4xf32, #tpu.memory_space<vmem>>, vector<64x4xf32>
    %cst_5 = arith.constant dense<0.000000e+00> : vector<4x4xf32>
    %5 = tpu.matmul %3, %4, %cst_5 {dimension_numbers = #tpu.dot_dimension_numbers<[1], [0], [0], [1], [0, 0, 1, 1], [], []>} : vector<4x64xf32>, vector<64x4xf32>, vector<4x4xf32> -> vector<4x4xf32>
    %c0_6 = arith.constant 0 : index
    %c0_7 = arith.constant 0 : index
    %6 = vector.load %arg3[%c0_6, %c0_7] : memref<1x4xf32, #tpu.memory_space<vmem>>, vector<1x4xf32>
    %7 = vector.broadcast %6 : vector<1x4xf32> to vector<4x4xf32>
    %8 = arith.addf %5, %7 : vector<4x4xf32>
    %cst_8 = arith.constant 0.000000e+00 : f32
    %9 = vector.broadcast %cst_8 : f32 to vector<4x4xf32>
    %10 = arith.maximumf %8, %9 : vector<4x4xf32>
    %c0_9 = arith.constant 0 : index
    %c0_10 = arith.constant 0 : index
    %11 = vector.load %arg4[%c0_9, %c0_10] : memref<4x64xf32, #tpu.memory_space<vmem>>, vector<4x64xf32>
    %cst_11 = arith.constant dense<0.000000e+00> : vector<4x64xf32>
    %12 = tpu.matmul %10, %11, %cst_11 {dimension_numbers = #tpu.dot_dimension_numbers<[1], [0], [0], [1], [0, 0, 1, 1], [], []>} : vector<4x4xf32>, vector<4x64xf32>, vector<4x64xf32> -> vector<4x64xf32>
    %c0_12 = arith.constant 0 : index
    %c0_13 = arith.constant 0 : index
    %13 = vector.load %arg5[%c0_12, %c0_13] : memref<1x64xf32, #tpu.memory_space<vmem>>, vector<1x64xf32>
    %14 = vector.broadcast %13 : vector<1x64xf32> to vector<4x64xf32>
    %15 = arith.addf %12, %14 : vector<4x64xf32>
    %16 = arith.negf %15 : vector<4x64xf32>
    %17 = math.exp %16 : vector<4x64xf32>
    %cst_14 = arith.constant 1.000000e+00 : f32
    %18 = vector.broadcast %cst_14 : f32 to vector<4x64xf32>
    %19 = arith.addf %18, %17 : vector<4x64xf32>
    %20 = arith.divf %18, %19 : vector<4x64xf32>
    %c0_15 = arith.constant 0 : index
    %c0_16 = arith.constant 0 : index
    %c0_17 = arith.constant 0 : index
    %21 = vector.load %arg1[%c0_15, %c0_16, %c0_17] : memref<4x64x128xf32, #tpu.memory_space<vmem>>, vector<4x64x128xf32>
    %22 = vector.shape_cast %20 : vector<4x64xf32> to vector<4x64x1xf32>
    %23 = vector.broadcast %22 : vector<4x64x1xf32> to vector<4x64x128xf32>
    %24 = arith.mulf %21, %23 : vector<4x64x128xf32>
    %c0_18 = arith.constant 0 : index
    %c0_19 = arith.constant 0 : index
    %c0_20 = arith.constant 0 : index
    %25 = vector.load %arg6[%c0_18, %c0_19, %c0_20] : memref<4x64x128xf32, #tpu.memory_space<vmem>>, vector<4x64x128xf32>
    tpu.vector_store %arg6[%c0_18, %c0_19, %c0_20], %24 {strides = array<i32>} : memref<4x64x128xf32, #tpu.memory_space<vmem>>, vector<4x64x128xf32>,
    return
  }
  func.func @transform_0(%arg0: i32) -> (i32, i32, i32) {
    %c0_i32 = arith.constant 0 : i32
    %c0_i32_0 = arith.constant 0 : i32
    %c0_i32_1 = arith.constant 0 : i32
    return %arg0, %c0_i32, %c0_i32_0 : i32, i32, i32
  }
  func.func @transform_1(%arg0: i32) -> (i32, i32) {
    %c0_i32 = arith.constant 0 : i32
    %c0_i32_0 = arith.constant 0 : i32
    %c0_i32_1 = arith.constant 0 : i32
    return %c0_i32, %c0_i32_0 : i32, i32
  }
  func.func @transform_2(%arg0: i32) -> (i32, i32) {
    %c0_i32 = arith.constant 0 : i32
    %c0_i32_0 = arith.constant 0 : i32
    %c0_i32_1 = arith.constant 0 : i32
    return %c0_i32, %c0_i32_0 : i32, i32
  }
  func.func @transform_3(%arg0: i32) -> (i32, i32) {
    %c0_i32 = arith.constant 0 : i32
    %c0_i32_0 = arith.constant 0 : i32
    %c0_i32_1 = arith.constant 0 : i32
    return %c0_i32, %c0_i32_0 : i32, i32
  }
  func.func @transform_4(%arg0: i32) -> (i32, i32) {
    %c0_i32 = arith.constant 0 : i32
    %c0_i32_0 = arith.constant 0 : i32
    %c0_i32_1 = arith.constant 0 : i32
    return %c0_i32, %c0_i32_0 : i32, i32
  }
  func.func @transform_5(%arg0: i32) -> (i32, i32, i32) {
    %c0_i32 = arith.constant 0 : i32
    %c0_i32_0 = arith.constant 0 : i32
    %c0_i32_1 = arith.constant 0 : i32
    return %arg0, %c0_i32, %c0_i32_0 : i32, i32, i32
  }
}

</mosaic_0001>

<llo_original>
// kernel: tpu_custom_call.1
$region0: #{tpu_custom_call.1}
  #allocation0 [shape = 'u32[]', space=smem, size = 0x4, offset = 0x4, fixed_abs, tag = 'smem constant byte address 0x4 - core index']
  #allocation1 [shape = 'u32[144,128]{1,0:T(1,128)}', space=vmem, size = 0x12000, scoped, tag = 'internal scratch']
  %s0 = inlined_call_operand.hbm [shape: f32[8,64,128], index: 0, kind: input, shape index: {}]
  %s1 = inlined_call_operand.vmem [shape: f32[64,4], index: 1, kind: input, shape index: {}]
  %s2 = inlined_call_operand.vmem [shape: f32[1,4], index: 2, kind: input, shape index: {}]
  %s3 = inlined_call_operand.vmem [shape: f32[4,64], index: 3, kind: input, shape index: {}]
  %s4 = inlined_call_operand.vmem [shape: f32[1,64], index: 4, kind: input, shape index: {}]
  %s5 = inlined_call_operand.hbm [shape: f32[8,64,128], index: 5, kind: output, shape index: {}]
  %s6 = sld [smem:[#allocation0]]
  $region57: #{tpu_custom_call.1} parent=0
    _
  %s8 = ssub.s32 1, %s6
  %s9 = scalar_select 0, %s8, %s6
  $region1: #{tpu_custom_call.1} parent=0
    #allocation2 [shape = 'u8[262144]{0}', space=vmem, size = 0x40000, scoped, tag = 'input window, operand 0']
    #allocation3 [shape = 's32[2]{0}', space=sflag, size = 0x8, scoped, tag = 'scoped memory for tpu_custom_call.1']
    #allocation4 [shape = 's32[2]{0}', space=sflag, size = 0x8, scoped, tag = 'scoped memory for tpu_custom_call.1']
    #allocation5 [shape = 'u8[262144]{0}', space=vmem, size = 0x40000, scoped, tag = 'output window, operand 0']
    %10 = vsyncpa [#allocation3], 0
    %s11 = scalar_lea.sflag [#allocation3], 1
    %12 = vsyncpa %s11, 0
    %13 = vsyncpa [#allocation4], 0
    %s14 = scalar_lea.sflag [#allocation4], 1
    %15 = vsyncpa %s14, 0
    loop: start=0, step=1, limit=4
    $region2: #{tpu_custom_call.1} parent=1 // loop_pre_header
      _
    $region3: #{tpu_custom_call.1} parent=1 // loop_header
      %s17 = sphi 0, %s21
      %p18 = scmp.ge.s32.totalorder %s17, 4
      %s27 = sphi 0, %s29
      %s30 = sphi 0, %s27
      %s31 = sphi 0, %s30
      %s47 = sphi 0, %s31
      %s51 = sphi 0, %s51
      %s53 = sphi 0, %s51
      %s54 = sphi 0, %s53
      %s68 = sphi 0, %s54
      %s72 = sphi 0, %s72
      %s74 = sphi 0, %s72
      %s75 = sphi 0, %s74
      %s89 = sphi 0, %s75
      %s93 = sphi 0, %s93
      %s95 = sphi 0, %s93
      %s96 = sphi 0, %s95
      %s110 = sphi 0, %s96
      %s114 = sphi 0, %s114
      %s116 = sphi 0, %s114
      %s117 = sphi 0, %s116
      %s131 = sphi 0, %s117
      %s137 = sphi 0, %s139
      %s140 = sphi 0, %s137
      %s141 = sphi 0, %s140
      %s157 = sphi 0, %s141
    $region4: #{tpu_custom_call.1} parent=1 // loop_header_branch
      %20 = sbr.rel (%p18) target = $region8
    $region5: #{tpu_custom_call.1} parent=1 // loop_body
      %s22 = ssub.s32 %s17, 1
      %s23 = ssub.s32 %s17, 2
      %s24 = sadd.s32 %s17, 1
      %s25 = ssub.s32 %s17, %s24
      %p26 = scmp.eq.s32.totalorder %s25, 0
      %s28 = sadd.s32 %s27, 1
      %s29 = scalar_select %p26, %s27, %s28
      %p32 = pneg %p26
      %p33 = scmp.eq.s32.totalorder %s17, 1
      %p34 = por %p32, %p33
      %p35 = scmp.ne.s32.totalorder %s27, %s30
      %p36 = scmp.eq.s32.totalorder %s17, 0
      %p37 = por %p35, %p36
      %p38 = scmp.ne.s32.totalorder %s27, %s30
      %p39 = scmp.eq.s32.totalorder %s22, 1
      %p40 = por %p38, %p39
      %p41 = scmp.ne.s32.totalorder %s30, %s31
      %p42 = scmp.eq.s32.totalorder %s22, 0
      %p43 = por %p41, %p42
      %p44 = scmp.ne.s32.totalorder %s30, %s31
      %p45 = scmp.eq.s32.totalorder %s23, 1
      %p46 = por %p44, %p45
      %p48 = scmp.ne.s32.totalorder %s31, %s47
      %p49 = scmp.eq.s32.totalorder %s23, 0
      %p50 = por %p48, %p49
      %s52 = sadd.s32 %s51, 1
      %p55 = scmp.eq.s32.totalorder %s17, 1
      %p56 = scmp.ne.s32.totalorder %s51, %s53
      %p57 = scmp.eq.s32.totalorder %s17, 0
      %p58 = por %p56, %p57
      %p59 = scmp.ne.s32.totalorder %s51, %s53
      %p60 = scmp.eq.s32.totalorder %s22, 1
      %p61 = por %p59, %p60
      %p62 = scmp.ne.s32.totalorder %s53, %s54
      %p63 = scmp.eq.s32.totalorder %s22, 0
      %p64 = por %p62, %p63
      %p65 = scmp.ne.s32.totalorder %s53, %s54
      %p66 = scmp.eq.s32.totalorder %s23, 1
      %p67 = por %p65, %p66
      %p69 = scmp.ne.s32.totalorder %s54, %s68
      %p70 = scmp.eq.s32.totalorder %s23, 0
      %p71 = por %p69, %p70
      %s73 = sadd.s32 %s72, 1
      %p76 = scmp.eq.s32.totalorder %s17, 1
      %p77 = scmp.ne.s32.totalorder %s72, %s74
      %p78 = scmp.eq.s32.totalorder %s17, 0
      %p79 = por %p77, %p78
      %p80 = scmp.ne.s32.totalorder %s72, %s74
      %p81 = scmp.eq.s32.totalorder %s22, 1
      %p82 = por %p80, %p81
      %p83 = scmp.ne.s32.totalorder %s74, %s75
      %p84 = scmp.eq.s32.totalorder %s22, 0
      %p85 = por %p83, %p84
      %p86 = scmp.ne.s32.totalorder %s74, %s75
      %p87 = scmp.eq.s32.totalorder %s23, 1
      %p88 = por %p86, %p87
      %p90 = scmp.ne.s32.totalorder %s75, %s89
      %p91 = scmp.eq.s32.totalorder %s23, 0
      %p92 = por %p90, %p91
      %s94 = sadd.s32 %s93, 1
      %p97 = scmp.eq.s32.totalorder %s17, 1
      %p98 = scmp.ne.s32.totalorder %s93, %s95
      %p99 = scmp.eq.s32.totalorder %s17, 0
      %p100 = por %p98, %p99
      %p101 = scmp.ne.s32.totalorder %s93, %s95
      %p102 = scmp.eq.s32.totalorder %s22, 1
      %p103 = por %p101, %p102
      %p104 = scmp.ne.s32.totalorder %s95, %s96
      %p105 = scmp.eq.s32.totalorder %s22, 0
      %p106 = por %p104, %p105
      %p107 = scmp.ne.s32.totalorder %s95, %s96
      %p108 = scmp.eq.s32.totalorder %s23, 1
      %p109 = por %p107, %p108
      %p111 = scmp.ne.s32.totalorder %s96, %s110
      %p112 = scmp.eq.s32.totalorder %s23, 0
      %p113 = por %p111, %p112
      %s115 = sadd.s32 %s114, 1
      %p118 = scmp.eq.s32.totalorder %s17, 1
      %p119 = scmp.ne.s32.totalorder %s114, %s116
      %p120 = scmp.eq.s32.totalorder %s17, 0
      %p121 = por %p119, %p120
      %p122 = scmp.ne.s32.totalorder %s114, %s116
      %p123 = scmp.eq.s32.totalorder %s22, 1
      %p124 = por %p122, %p123
      %p125 = scmp.ne.s32.totalorder %s116, %s117
      %p126 = scmp.eq.s32.totalorder %s22, 0
      %p127 = por %p125, %p126
      %p128 = scmp.ne.s32.totalorder %s116, %s117
      %p129 = scmp.eq.s32.totalorder %s23, 1
      %p130 = por %p128, %p129
      %p132 = scmp.ne.s32.totalorder %s117, %s131
      %p133 = scmp.eq.s32.totalorder %s23, 0
      %p134 = por %p132, %p133
      %s135 = ssub.s32 %s17, %s24
      %p136 = scmp.eq.s32.totalorder %s135, 0
      %s138 = sadd.s32 %s137, 1
      %s139 = scalar_select %p136, %s137, %s138
      %p142 = pneg %p136
      %p143 = scmp.eq.s32.totalorder %s17, 1
      %p144 = por %p142, %p143
      %p145 = scmp.ne.s32.totalorder %s137, %s140
      %p146 = scmp.eq.s32.totalorder %s17, 0
      %p147 = por %p145, %p146
      %p148 = scmp.ne.s32.totalorder %s137, %s140
      %p149 = scmp.eq.s32.totalorder %s22, 1
      %p150 = por %p148, %p149
      %p151 = scmp.ne.s32.totalorder %s140, %s141
      %p152 = scmp.eq.s32.totalorder %s22, 0
      %p153 = por %p151, %p152
      %p154 = scmp.ne.s32.totalorder %s140, %s141
      %p155 = scmp.eq.s32.totalorder %s23, 1
      %p156 = por %p154, %p155
      %p158 = scmp.ne.s32.totalorder %s141, %s157
      %p159 = scmp.eq.s32.totalorder %s23, 0
      %p160 = por %p158, %p159
      %p161 = scmp.le.s32.totalorder 1, %s17
      %p162 = scmp.lt.s32.totalorder %s17, 3
      %p163 = pnand %p161, %p162
      %p164 = pneg %p163
      // Predicated region
      $region9: #{tpu_custom_call.1} parent=5 // pred_check
        _
      $region10: #{tpu_custom_call.1} parent=5 // pred_check_branch
        %166 = sbr.rel (%p163) target = $region12
      $region11: #{tpu_custom_call.1} parent=5 // pred_region
        %s167 = ssub.s32 %s17, 1
        // Predicated region
        $region13: #{tpu_custom_call.1} parent=11 // pred_check
          %p168 = pneg %p64
        $region14: #{tpu_custom_call.1} parent=11 // pred_check_branch
          %170 = sbr.rel (%p168) target = $region16
        $region15: #{tpu_custom_call.1} parent=11 // pred_region
          _
        $region16: #{tpu_custom_call.1} parent=11 // pred_fallthru
          _
        // Predicated region
        $region17: #{tpu_custom_call.1} parent=11 // pred_check
          %p171 = pneg %p85
        $region18: #{tpu_custom_call.1} parent=11 // pred_check_branch
          %173 = sbr.rel (%p171) target = $region20
        $region19: #{tpu_custom_call.1} parent=11 // pred_region
          _
        $region20: #{tpu_custom_call.1} parent=11 // pred_fallthru
          _
        // Predicated region
        $region21: #{tpu_custom_call.1} parent=11 // pred_check
          %p174 = pneg %p106
        $region22: #{tpu_custom_call.1} parent=11 // pred_check_branch
          %176 = sbr.rel (%p174) target = $region24
        $region23: #{tpu_custom_call.1} parent=11 // pred_region
          _
        $region24: #{tpu_custom_call.1} parent=11 // pred_fallthru
          _
        // Predicated region
        $region25: #{tpu_custom_call.1} parent=11 // pred_check
          %p177 = pneg %p127
        $region26: #{tpu_custom_call.1} parent=11 // pred_check_branch
          %179 = sbr.rel (%p177) target = $region28
        $region27: #{tpu_custom_call.1} parent=11 // pred_region
          _
        $region28: #{tpu_custom_call.1} parent=11 // pred_fallthru
          _
      $region12: #{tpu_custom_call.1} parent=5 // pred_fallthru
        _
      %p180 = scmp.lt.s32.totalorder %s17, 2
      // Predicated region
      $region29: #{tpu_custom_call.1} parent=5 // pred_check
        %p181 = pneg %p180
      $region30: #{tpu_custom_call.1} parent=5 // pred_check_branch
        %183 = sbr.rel (%p181) target = $region32
      $region31: #{tpu_custom_call.1} parent=5 // pred_region
        // Predicated region
        $region33: #{tpu_custom_call.1} parent=31 // pred_check
          %p184 = pneg %p37
        $region34: #{tpu_custom_call.1} parent=31 // pred_check_branch
          %186 = sbr.rel (%p184) target = $region36
        $region35: #{tpu_custom_call.1} parent=31 // pred_region
          %s187 = sand.u32 %s27, 1
          %s188 = scalar_lea.sflag [#allocation3], %s187
          %s189 = sand.u32 %s27, 1
          %s190 = smul.addr %s189, 256
          %s191 = scalar_lea.vmem [#allocation2], %s190
          %s192 = smul.u32 4, %s17
          %s194 = ssub.s32 4096, 4096
          %195 = vsyncadd %s188, %s194
          %s196 = smul.addr %s192, 8
          %s197 = smul.addr %s196, 128
          %s198 = scalar_lea.hbm %s0, %s197
          %s199 = sshll.u32 %s191, 4
          %s200 = int_to_ptr.vmem [resolvable:$true] %s199
          %205 = dma.hbm_to_vmem [thread:$0]  %s198, 4096, %s200, %s188, 128, 128, 8
        $region36: #{tpu_custom_call.1} parent=31 // pred_fallthru
          _
      $region32: #{tpu_custom_call.1} parent=5 // pred_fallthru
        _
      %p206 = scmp.le.s32.totalorder 1, %s17
      %p207 = scmp.lt.s32.totalorder %s17, 3
      %p208 = pnand %p206, %p207
      %p209 = pneg %p208
      // Predicated region
      $region37: #{tpu_custom_call.1} parent=5 // pred_check
        _
      $region38: #{tpu_custom_call.1} parent=5 // pred_check_branch
        %211 = sbr.rel (%p208) target = $region40
      $region39: #{tpu_custom_call.1} parent=5 // pred_region
        %s212 = ssub.s32 %s17, 1
        %s213 = sand.u32 %s30, 1
        %s214 = scalar_lea.sflag [#allocation3], %s213
        %s215 = sand.u32 %s30, 1
        %s216 = smul.addr %s215, 256
        %s217 = scalar_lea.vmem [#allocation2], %s216
        // Predicated region
        $region41: #{tpu_custom_call.1} parent=39 // pred_check
          %p218 = pneg %p43
        $region42: #{tpu_custom_call.1} parent=39 // pred_check_branch
          %220 = sbr.rel (%p218) target = $region44
        $region43: #{tpu_custom_call.1} parent=39 // pred_region
          %221 = dma.done %s214, 4096
        $region44: #{tpu_custom_call.1} parent=39 // pred_fallthru
          _
        %s222 = sand.u32 %s30, 1
        %s223 = scalar_lea.sflag [#allocation3], %s222
        %s224 = sand.u32 %s30, 1
        %s225 = smul.addr %s224, 256
        %s226 = scalar_lea.vmem [#allocation2], %s225
        %p227 = pneg %p43
        %p228 = pneg %p40
        %p229 = pneg %p64
        %p230 = pneg %p61
        %p231 = pneg %p85
        %p232 = pneg %p82
        %p233 = pneg %p106
        %p234 = pneg %p103
        %p235 = pneg %p127
        %p236 = pneg %p124
        %p237 = pneg %p153
        %p238 = pneg %p150
        %s239 = sand.u32 %s140, 1
        %s240 = scalar_lea.sflag [#allocation4], %s239
        %s241 = sand.u32 %s140, 1
        %s242 = smul.addr %s241, 256
        %s243 = scalar_lea.vmem [#allocation5], %s242
        %s244 = smul.u32 4, %s22
        %s245 = smul.u32 4, %s22
        %v246 = vld [vmem:[%s217] sm:$0xff]
        %v247 = vld [vmem:[%s217 + $0x8] sm:$0xff]
        %v248 = vld [vmem:[%s217 + $0x10] sm:$0xff]
        %v249 = vld [vmem:[%s217 + $0x18] sm:$0xff]
        %v250 = vld [vmem:[%s217 + $0x20] sm:$0xff]
        %v251 = vld [vmem:[%s217 + $0x28] sm:$0xff]
        %v252 = vld [vmem:[%s217 + $0x30] sm:$0xff]
        %v253 = vld [vmem:[%s217 + $0x38] sm:$0xff]
        %v254 = vld [vmem:[%s217 + $0x40] sm:$0xff]
        %v255 = vld [vmem:[%s217 + $0x48] sm:$0xff]
        %v256 = vld [vmem:[%s217 + $0x50] sm:$0xff]
        %v257 = vld [vmem:[%s217 + $0x58] sm:$0xff]
        %v258 = vld [vmem:[%s217 + $0x60] sm:$0xff]
        %v259 = vld [vmem:[%s217 + $0x68] sm:$0xff]
        %v260 = vld [vmem:[%s217 + $0x70] sm:$0xff]
        %v261 = vld [vmem:[%s217 + $0x78] sm:$0xff]
        %v262 = vld [vmem:[%s217 + $0x80] sm:$0xff]
        %v263 = vld [vmem:[%s217 + $0x88] sm:$0xff]
        %v264 = vld [vmem:[%s217 + $0x90] sm:$0xff]
        %v265 = vld [vmem:[%s217 + $0x98] sm:$0xff]
        %v266 = vld [vmem:[%s217 + $0xa0] sm:$0xff]
        %v267 = vld [vmem:[%s217 + $0xa8] sm:$0xff]
        %v268 = vld [vmem:[%s217 + $0xb0] sm:$0xff]
        %v269 = vld [vmem:[%s217 + $0xb8] sm:$0xff]
        %v270 = vld [vmem:[%s217 + $0xc0] sm:$0xff]
        %v271 = vld [vmem:[%s217 + $0xc8] sm:$0xff]
        %v272 = vld [vmem:[%s217 + $0xd0] sm:$0xff]
        %v273 = vld [vmem:[%s217 + $0xd8] sm:$0xff]
        %v274 = vld [vmem:[%s217 + $0xe0] sm:$0xff]
        %v275 = vld [vmem:[%s217 + $0xe8] sm:$0xff]
        %v276 = vld [vmem:[%s217 + $0xf0] sm:$0xff]
        %v277 = vld [vmem:[%s217 + $0xf8] sm:$0xff]
        %278 = vadd.xlane.f32.xlu0 %v246
        %v279 = vpop.xlane.xlu0 %278
        %280 = vadd.xlane.f32.xlu0 %v247
        %v281 = vpop.xlane.xlu0 %280
        %282 = vadd.xlane.f32.xlu0 %v248
        %v283 = vpop.xlane.xlu0 %282
        %284 = vadd.xlane.f32.xlu0 %v249
        %v285 = vpop.xlane.xlu0 %284
        %286 = vadd.xlane.f32.xlu0 %v250
        %v287 = vpop.xlane.xlu0 %286
        %288 = vadd.xlane.f32.xlu0 %v251
        %v289 = vpop.xlane.xlu0 %288
        %290 = vadd.xlane.f32.xlu0 %v252
        %v291 = vpop.xlane.xlu0 %290
        %292 = vadd.xlane.f32.xlu0 %v253
        %v293 = vpop.xlane.xlu0 %292
        %294 = vadd.xlane.f32.xlu0 %v254
        %v295 = vpop.xlane.xlu0 %294
        %296 = vadd.xlane.f32.xlu0 %v255
        %v297 = vpop.xlane.xlu0 %296
        %298 = vadd.xlane.f32.xlu0 %v256
        %v299 = vpop.xlane.xlu0 %298
        %300 = vadd.xlane.f32.xlu0 %v257
        %v301 = vpop.xlane.xlu0 %300
        %302 = vadd.xlane.f32.xlu0 %v258
        %v303 = vpop.xlane.xlu0 %302
        %304 = vadd.xlane.f32.xlu0 %v259
        %v305 = vpop.xlane.xlu0 %304
        %306 = vadd.xlane.f32.xlu0 %v260
        %v307 = vpop.xlane.xlu0 %306
        %308 = vadd.xlane.f32.xlu0 %v261
        %v309 = vpop.xlane.xlu0 %308
        %310 = vadd.xlane.f32.xlu0 %v262
        %v311 = vpop.xlane.xlu0 %310
        %312 = vadd.xlane.f32.xlu0 %v263
        %v313 = vpop.xlane.xlu0 %312
        %314 = vadd.xlane.f32.xlu0 %v264
        %v315 = vpop.xlane.xlu0 %314
        %316 = vadd.xlane.f32.xlu0 %v265
        %v317 = vpop.xlane.xlu0 %316
        %318 = vadd.xlane.f32.xlu0 %v266
        %v319 = vpop.xlane.xlu0 %318
        %320 = vadd.xlane.f32.xlu0 %v267
        %v321 = vpop.xlane.xlu0 %320
        %322 = vadd.xlane.f32.xlu0 %v268
        %v323 = vpop.xlane.xlu0 %322
        %324 = vadd.xlane.f32.xlu0 %v269
        %v325 = vpop.xlane.xlu0 %324
        %326 = vadd.xlane.f32.xlu0 %v270
        %v327 = vpop.xlane.xlu0 %326
        %328 = vadd.xlane.f32.xlu0 %v271
        %v329 = vpop.xlane.xlu0 %328
        %330 = vadd.xlane.f32.xlu0 %v272
        %v331 = vpop.xlane.xlu0 %330
        %332 = vadd.xlane.f32.xlu0 %v273
        %v333 = vpop.xlane.xlu0 %332
        %334 = vadd.xlane.f32.xlu0 %v274
        %v335 = vpop.xlane.xlu0 %334
        %336 = vadd.xlane.f32.xlu0 %v275
        %v337 = vpop.xlane.xlu0 %336
        %338 = vadd.xlane.f32.xlu0 %v276
        %v339 = vpop.xlane.xlu0 %338
        %340 = vadd.xlane.f32.xlu0 %v277
        %v341 = vpop.xlane.xlu0 %340
        %v342 = vmul.f32 %v279, 0.0078125
        %v343 = vmul.f32 %v281, 0.0078125
        %v344 = vmul.f32 %v283, 0.0078125
        %v345 = vmul.f32 %v285, 0.0078125
        %v346 = vmul.f32 %v287, 0.0078125
        %v347 = vmul.f32 %v289, 0.0078125
        %v348 = vmul.f32 %v291, 0.0078125
        %v349 = vmul.f32 %v293, 0.0078125
        %v350 = vmul.f32 %v295, 0.0078125
        %v351 = vmul.f32 %v297, 0.0078125
        %v352 = vmul.f32 %v299, 0.0078125
        %v353 = vmul.f32 %v301, 0.0078125
        %v354 = vmul.f32 %v303, 0.0078125
        %v355 = vmul.f32 %v305, 0.0078125
        %v356 = vmul.f32 %v307, 0.0078125
        %v357 = vmul.f32 %v309, 0.0078125
        %v358 = vmul.f32 %v311, 0.0078125
        %v359 = vmul.f32 %v313, 0.0078125
        %v360 = vmul.f32 %v315, 0.0078125
        %v361 = vmul.f32 %v317, 0.0078125
        %v362 = vmul.f32 %v319, 0.0078125
        %v363 = vmul.f32 %v321, 0.0078125
        %v364 = vmul.f32 %v323, 0.0078125
        %v365 = vmul.f32 %v325, 0.0078125
        %v366 = vmul.f32 %v327, 0.0078125
        %v367 = vmul.f32 %v329, 0.0078125
        %v368 = vmul.f32 %v331, 0.0078125
        %v369 = vmul.f32 %v333, 0.0078125
        %v370 = vmul.f32 %v335, 0.0078125
        %v371 = vmul.f32 %v337, 0.0078125
        %v372 = vmul.f32 %v339, 0.0078125
        %v373 = vmul.f32 %v341, 0.0078125
        %v374 = vld [vmem:[%s1] sm:$0xff]
        %v375 = vld [vmem:[%s1 + $0x8] sm:$0xff]
        %v376 = vld [vmem:[%s1 + $0x10] sm:$0xff]
        %v377 = vld [vmem:[%s1 + $0x18] sm:$0xff]
        %v378 = vld [vmem:[%s1 + $0x20] sm:$0xff]
        %v379 = vld [vmem:[%s1 + $0x28] sm:$0xff]
        %v380 = vld [vmem:[%s1 + $0x30] sm:$0xff]
        %v381 = vld [vmem:[%s1 + $0x38] sm:$0xff]
        %v382 = vld [vmem:[%s2] sm:$0x1]
        %v384 = vlaneseq
        %v385 = vshrl.u32 %v384, 7
        %v386 = vsub.s32 0, %v385
        %v387 = vrot.slane %v382, %v386
        %v421 = vlaneseq
        %v422 = vand.u32 %v421, 127
        %v423 = vlaneseq
        %v424 = vshrl.u32 %v423, 7
        %v425 = vsub.s32 %v422, %v424
        %v426 = vrot.slane %v342, %v425
        %v427 = vadd.s32 %v422, 4294967288
        %v428 = vlaneseq
        %v429 = vshrl.u32 %v428, 7
        %v430 = vsub.s32 %v427, %v429
        %v431 = vrot.slane %v343, %v430
        %vm432 = vcmask 130112
        %v433 = vsel %vm432, %v431, %v426
        %v434 = vadd.s32 %v422, 4294967280
        %v435 = vlaneseq
        %v436 = vshrl.u32 %v435, 7
        %v437 = vsub.s32 %v434, %v436
        %v438 = vrot.slane %v344, %v437
        %vm439 = vcmask 195712
        %v440 = vsel %vm439, %v438, %v433
        %v441 = vadd.s32 %v422, 4294967272
        %v442 = vlaneseq
        %v443 = vshrl.u32 %v442, 7
        %v444 = vsub.s32 %v441, %v443
        %v445 = vrot.slane %v345, %v444
        %vm446 = vcmask 261312
        %v447 = vsel %vm446, %v445, %v440
        %v448 = vadd.s32 %v422, 4294967264
        %v449 = vlaneseq
        %v450 = vshrl.u32 %v449, 7
        %v451 = vsub.s32 %v448, %v450
        %v452 = vrot.slane %v346, %v451
        %vm453 = vcmask 326912
        %v454 = vsel %vm453, %v452, %v447
        %v455 = vadd.s32 %v422, 4294967256
        %v456 = vlaneseq
        %v457 = vshrl.u32 %v456, 7
        %v458 = vsub.s32 %v455, %v457
        %v459 = vrot.slane %v347, %v458
        %vm460 = vcmask 392512
        %v461 = vsel %vm460, %v459, %v454
        %v462 = vadd.s32 %v422, 4294967248
        %v463 = vlaneseq
        %v464 = vshrl.u32 %v463, 7
        %v465 = vsub.s32 %v462, %v464
        %v466 = vrot.slane %v348, %v465
        %vm467 = vcmask 458112
        %v468 = vsel %vm467, %v466, %v461
        %v469 = vadd.s32 %v422, 4294967240
        %v470 = vlaneseq
        %v471 = vshrl.u32 %v470, 7
        %v472 = vsub.s32 %v469, %v471
        %v473 = vrot.slane %v349, %v472
        %vm474 = vcmask 523712
        %v475 = vsel %vm474, %v473, %v468
        %v476 = vlaneseq
        %v477 = vshrl.u32 %v476, 7
        %v478 = vsub.s32 %v422, %v477
        %v479 = vrot.slane %v350, %v478
        %v480 = vlaneseq
        %v481 = vshrl.u32 %v480, 7
        %v482 = vsub.s32 %v427, %v481
        %v483 = vrot.slane %v351, %v482
        %v484 = vsel %vm432, %v483, %v479
        %v485 = vlaneseq
        %v486 = vshrl.u32 %v485, 7
        %v487 = vsub.s32 %v434, %v486
        %v488 = vrot.slane %v352, %v487
        %v489 = vsel %vm439, %v488, %v484
        %v490 = vlaneseq
        %v491 = vshrl.u32 %v490, 7
        %v492 = vsub.s32 %v441, %v491
        %v493 = vrot.slane %v353, %v492
        %v494 = vsel %vm446, %v493, %v489
        %v495 = vlaneseq
        %v496 = vshrl.u32 %v495, 7
        %v497 = vsub.s32 %v448, %v496
        %v498 = vrot.slane %v354, %v497
        %v499 = vsel %vm453, %v498, %v494
        %v500 = vlaneseq
        %v501 = vshrl.u32 %v500, 7
        %v502 = vsub.s32 %v455, %v501
        %v503 = vrot.slane %v355, %v502
        %v504 = vsel %vm460, %v503, %v499
        %v505 = vlaneseq
        %v506 = vshrl.u32 %v505, 7
        %v507 = vsub.s32 %v462, %v506
        %v508 = vrot.slane %v356, %v507
        %v509 = vsel %vm467, %v508, %v504
        %v510 = vlaneseq
        %v511 = vshrl.u32 %v510, 7
        %v512 = vsub.s32 %v469, %v511
        %v513 = vrot.slane %v357, %v512
        %v514 = vsel %vm474, %v513, %v509
        %v515 = vlaneseq
        %v516 = vshrl.u32 %v515, 7
        %v517 = vsub.s32 %v422, %v516
        %v518 = vrot.slane %v358, %v517
        %v519 = vlaneseq
        %v520 = vshrl.u32 %v519, 7
        %v521 = vsub.s32 %v427, %v520
        %v522 = vrot.slane %v359, %v521
        %v523 = vsel %vm432, %v522, %v518
        %v524 = vlaneseq
        %v525 = vshrl.u32 %v524, 7
        %v526 = vsub.s32 %v434, %v525
        %v527 = vrot.slane %v360, %v526
        %v528 = vsel %vm439, %v527, %v523
        %v529 = vlaneseq
        %v530 = vshrl.u32 %v529, 7
        %v531 = vsub.s32 %v441, %v530
        %v532 = vrot.slane %v361, %v531
        %v533 = vsel %vm446, %v532, %v528
        %v534 = vlaneseq
        %v535 = vshrl.u32 %v534, 7
        %v536 = vsub.s32 %v448, %v535
        %v537 = vrot.slane %v362, %v536
        %v538 = vsel %vm453, %v537, %v533
        %v539 = vlaneseq
        %v540 = vshrl.u32 %v539, 7
        %v541 = vsub.s32 %v455, %v540
        %v542 = vrot.slane %v363, %v541
        %v543 = vsel %vm460, %v542, %v538
        %v544 = vlaneseq
        %v545 = vshrl.u32 %v544, 7
        %v546 = vsub.s32 %v462, %v545
        %v547 = vrot.slane %v364, %v546
        %v548 = vsel %vm467, %v547, %v543
        %v549 = vlaneseq
        %v550 = vshrl.u32 %v549, 7
        %v551 = vsub.s32 %v469, %v550
        %v552 = vrot.slane %v365, %v551
        %v553 = vsel %vm474, %v552, %v548
        %v554 = vlaneseq
        %v555 = vshrl.u32 %v554, 7
        %v556 = vsub.s32 %v422, %v555
        %v557 = vrot.slane %v366, %v556
        %v558 = vlaneseq
        %v559 = vshrl.u32 %v558, 7
        %v560 = vsub.s32 %v427, %v559
        %v561 = vrot.slane %v367, %v560
        %v562 = vsel %vm432, %v561, %v557
        %v563 = vlaneseq
        %v564 = vshrl.u32 %v563, 7
        %v565 = vsub.s32 %v434, %v564
        %v566 = vrot.slane %v368, %v565
        %v567 = vsel %vm439, %v566, %v562
        %v568 = vlaneseq
        %v569 = vshrl.u32 %v568, 7
        %v570 = vsub.s32 %v441, %v569
        %v571 = vrot.slane %v369, %v570
        %v572 = vsel %vm446, %v571, %v567
        %v573 = vlaneseq
        %v574 = vshrl.u32 %v573, 7
        %v575 = vsub.s32 %v448, %v574
        %v576 = vrot.slane %v370, %v575
        %v577 = vsel %vm453, %v576, %v572
        %v578 = vlaneseq
        %v579 = vshrl.u32 %v578, 7
        %v580 = vsub.s32 %v455, %v579
        %v581 = vrot.slane %v371, %v580
        %v582 = vsel %vm460, %v581, %v577
        %v583 = vlaneseq
        %v584 = vshrl.u32 %v583, 7
        %v585 = vsub.s32 %v462, %v584
        %v586 = vrot.slane %v372, %v585
        %v587 = vsel %vm467, %v586, %v582
        %v588 = vlaneseq
        %v589 = vshrl.u32 %v588, 7
        %v590 = vsub.s32 %v469, %v589
        %v591 = vrot.slane %v373, %v590
        %v592 = vsel %vm474, %v591, %v587
        %vm593 = vcmask 1041409
        %v594 = vsel %vm593, %v514, %v475
        %vm595 = vcmask 1042434
        %v596 = vsel %vm595, %v553, %v594
        %vm597 = vcmask 1043459
        %v598 = vsel %vm597, %v592, %v596
        %vm599 = vcmask 523264
        %v600 = vsel %vm599, %v598, 0
        %602 = vmatprep.subr.mxu0 0.0
        %603 = vmatpush1.msra.mxu0 0.0
        %604 = vmatprep.subr.mxu0 0.0
        %605 = vmatpush1.msra.mxu0 0.0
        %606 = vmatprep.subr.mxu0 0.0
        %607 = vmatpush1.msra.mxu0 0.0
        %608 = vmatprep.subr.mxu0 0.0
        %609 = vmatpush1.msra.mxu0 0.0
        %610 = vmatprep.subr.mxu0 0.0
        %611 = vmatpush1.msra.mxu0 0.0
        %612 = vmatprep.subr.mxu0 0.0
        %613 = vmatpush1.msra.mxu0 0.0
        %614 = vmatprep.subr.mxu0 0.0
        %615 = vmatpush1.msra.mxu0 0.0
        %616 = vmatprep.subr.mxu0 0.0
        %617 = vmatpush1.msra.mxu0 0.0
        %618 = vmatprep.subr.mxu0 0.0
        %619 = vmatpush1.msra.mxu0 %v381
        %620 = vmatprep.subr.mxu0 0.0
        %621 = vmatpush1.msra.mxu0 %v380
        %622 = vmatprep.subr.mxu0 0.0
        %623 = vmatpush1.msra.mxu0 %v379
        %624 = vmatprep.subr.mxu0 0.0
        %625 = vmatpush1.msra.mxu0 %v378
        %626 = vmatprep.subr.mxu0 0.0
        %627 = vmatpush1.msra.mxu0 %v377
        %628 = vmatprep.subr.mxu0 0.0
        %629 = vmatpush1.msra.mxu0 %v376
        %630 = vmatprep.subr.mxu0 0.0
        %631 = vmatpush1.msra.mxu0 %v375
        %632 = vmatprep.subr.mxu0 0.0
        %633 = vmatpush1.msra.mxu0 %v374
        %634 = vmatprep.subr.mxu0 0.0
        %635 = vmatpush2.msra.mxu0 0.0
        %636 = vmatprep.subr.mxu0 0.0
        %637 = vmatpush2.msra.mxu0 0.0
        %638 = vmatprep.subr.mxu0 0.0
        %639 = vmatpush2.msra.mxu0 0.0
        %640 = vmatprep.subr.mxu0 0.0
        %641 = vmatpush2.msra.mxu0 0.0
        %642 = vmatprep.subr.mxu0 0.0
        %643 = vmatpush2.msra.mxu0 0.0
        %644 = vmatprep.subr.mxu0 0.0
        %645 = vmatpush2.msra.mxu0 0.0
        %646 = vmatprep.subr.mxu0 0.0
        %647 = vmatpush2.msra.mxu0 0.0
        %648 = vmatprep.subr.mxu0 0.0
        %649 = vmatpush2.msra.mxu0 0.0
        %650 = vmatprep.subr.mxu0 0.0
        %651 = vmatpush2.msra.mxu0 0.0
        %652 = vmatprep.subr.mxu0 0.0
        %653 = vmatpush2.msra.mxu0 0.0
        %654 = vmatprep.subr.mxu0 0.0
        %655 = vmatpush2.msra.mxu0 0.0
        %656 = vmatprep.subr.mxu0 0.0
        %657 = vmatpush2.msra.mxu0 0.0
        %658 = vmatprep.subr.mxu0 0.0
        %659 = vmatpush2.msra.mxu0 0.0
        %660 = vmatprep.subr.mxu0 0.0
        %661 = vmatpush2.msra.mxu0 0.0
        %662 = vmatprep.subr.mxu0 0.0
        %663 = vmatpush2.msra.mxu0 0.0
        %664 = vmatprep.subr.mxu0 0.0
        %665 = vmatpush2.msra.mxu0 0.0
        %666 = vmatprep.mubr.f32.mxu0 0.0
        %667 = vmatmul.mubr.f32.gmra.mxu0 %v600
        %v668 = vpop.f32.mrf.mxu0
        %v669 = vadd.f32 %v387, %v668
        %v670 = vpop.f32.mrf.mxu0
        %671 = vdwg.mxu0
        %v672 = vmax.f32 %v669, 0.0
        %v673 = vld [vmem:[%s3] sm:$0xf]
        %v674 = vld [vmem:[%s4] sm:$0x1]
        %v676 = vlaneseq
        %v677 = vshrl.u32 %v676, 7
        %v678 = vsub.s32 0, %v677
        %v679 = vrot.slane %v674, %v678
        %vm681 = vcmask 31744
        %v683 = vsel %vm681, %v672, 0
        %vm685 = vcmask 1043456
        %v687 = vsel %vm685, %v673, 0
        %689 = vmatprep.subr.mxu0 0.0
        %690 = vmatpush1.msra.mxu0 0.0
        %691 = vmatprep.subr.mxu0 0.0
        %692 = vmatpush1.msra.mxu0 0.0
        %693 = vmatprep.subr.mxu0 0.0
        %694 = vmatpush1.msra.mxu0 0.0
        %695 = vmatprep.subr.mxu0 0.0
        %696 = vmatpush1.msra.mxu0 0.0
        %697 = vmatprep.subr.mxu0 0.0
        %698 = vmatpush1.msra.mxu0 0.0
        %699 = vmatprep.subr.mxu0 0.0
        %700 = vmatpush1.msra.mxu0 0.0
        %701 = vmatprep.subr.mxu0 0.0
        %702 = vmatpush1.msra.mxu0 0.0
        %703 = vmatprep.subr.mxu0 0.0
        %704 = vmatpush1.msra.mxu0 0.0
        %705 = vmatprep.subr.mxu0 0.0
        %706 = vmatpush1.msra.mxu0 0.0
        %707 = vmatprep.subr.mxu0 0.0
        %708 = vmatpush1.msra.mxu0 0.0
        %709 = vmatprep.subr.mxu0 0.0
        %710 = vmatpush1.msra.mxu0 0.0
        %711 = vmatprep.subr.mxu0 0.0
        %712 = vmatpush1.msra.mxu0 0.0
        %713 = vmatprep.subr.mxu0 0.0
        %714 = vmatpush1.msra.mxu0 0.0
        %715 = vmatprep.subr.mxu0 0.0
        %716 = vmatpush1.msra.mxu0 0.0
        %717 = vmatprep.subr.mxu0 0.0
        %718 = vmatpush1.msra.mxu0 0.0
        %719 = vmatprep.subr.mxu0 0.0
        %720 = vmatpush1.msra.mxu0 %v687
        %721 = vmatprep.subr.mxu0 0.0
        %722 = vmatpush2.msra.mxu0 0.0
        %723 = vmatprep.subr.mxu0 0.0
        %724 = vmatpush2.msra.mxu0 0.0
        %725 = vmatprep.subr.mxu0 0.0
        %726 = vmatpush2.msra.mxu0 0.0
        %727 = vmatprep.subr.mxu0 0.0
        %728 = vmatpush2.msra.mxu0 0.0
        %729 = vmatprep.subr.mxu0 0.0
        %730 = vmatpush2.msra.mxu0 0.0
        %731 = vmatprep.subr.mxu0 0.0
        %732 = vmatpush2.msra.mxu0 0.0
        %733 = vmatprep.subr.mxu0 0.0
        %734 = vmatpush2.msra.mxu0 0.0
        %735 = vmatprep.subr.mxu0 0.0
        %736 = vmatpush2.msra.mxu0 0.0
        %737 = vmatprep.subr.mxu0 0.0
        %738 = vmatpush2.msra.mxu0 0.0
        %739 = vmatprep.subr.mxu0 0.0
        %740 = vmatpush2.msra.mxu0 0.0
        %741 = vmatprep.subr.mxu0 0.0
        %742 = vmatpush2.msra.mxu0 0.0
        %743 = vmatprep.subr.mxu0 0.0
        %744 = vmatpush2.msra.mxu0 0.0
        %745 = vmatprep.subr.mxu0 0.0
        %746 = vmatpush2.msra.mxu0 0.0
        %747 = vmatprep.subr.mxu0 0.0
        %748 = vmatpush2.msra.mxu0 0.0
        %749 = vmatprep.subr.mxu0 0.0
        %750 = vmatpush2.msra.mxu0 0.0
        %751 = vmatprep.subr.mxu0 0.0
        %752 = vmatpush2.msra.mxu0 0.0
        %753 = vmatprep.mubr.f32.mxu0 0.0
        %754 = vmatmul.mubr.f32.gmra.mxu0 %v683
        %v755 = vpop.f32.mrf.mxu0
        %v756 = vadd.f32 %v679, %v755
        %v757 = vpop.f32.mrf.mxu0
        %758 = vdwg.mxu0
        %v759 = vxor.u32 %v756, 2147483648
        %v760 = vmul.f32 %v759, 1.442695
        %v761 = vpow.pop %v760
        %v762 = vadd.f32 %v761, 1.0
        %v763 = vrcp.pop %v762
        %v764 = vmul.f32 1.0, %v763
        %v765 = vlaneseq
        %v766 = vshrl.u32 %v765, 7
        %v767 = vsub.s32 0, %v766
        %v768 = vrot.slane %v764, %v767
        %770 = vbcast.lane.b32.xlu0 %v768, 256
        %v771 = vpop.permute.xlu0 %770
        %s773 = sor.u32 256, 8
        %774 = vbcast.lane.b32.xlu0 %v768, %s773
        %v775 = vpop.permute.xlu0 %774
        %s777 = sor.u32 256, 16
        %778 = vbcast.lane.b32.xlu0 %v768, %s777
        %v779 = vpop.permute.xlu0 %778
        %s781 = sor.u32 256, 24
        %782 = vbcast.lane.b32.xlu0 %v768, %s781
        %v783 = vpop.permute.xlu0 %782
        %s785 = sor.u32 256, 32
        %786 = vbcast.lane.b32.xlu0 %v768, %s785
        %v787 = vpop.permute.xlu0 %786
        %s789 = sor.u32 256, 40
        %790 = vbcast.lane.b32.xlu0 %v768, %s789
        %v791 = vpop.permute.xlu0 %790
        %s793 = sor.u32 256, 48
        %794 = vbcast.lane.b32.xlu0 %v768, %s793
        %v795 = vpop.permute.xlu0 %794
        %s797 = sor.u32 256, 56
        %798 = vbcast.lane.b32.xlu0 %v768, %s797
        %v799 = vpop.permute.xlu0 %798
        %v800 = vlaneseq
        %v801 = vshrl.u32 %v800, 7
        %v802 = vsub.s32 1, %v801
        %v803 = vrot.slane %v764, %v802
        %805 = vbcast.lane.b32.xlu0 %v803, 256
        %v806 = vpop.permute.xlu0 %805
        %s808 = sor.u32 256, 8
        %809 = vbcast.lane.b32.xlu0 %v803, %s808
        %v810 = vpop.permute.xlu0 %809
        %s812 = sor.u32 256, 16
        %813 = vbcast.lane.b32.xlu0 %v803, %s812
        %v814 = vpop.permute.xlu0 %813
        %s816 = sor.u32 256, 24
        %817 = vbcast.lane.b32.xlu0 %v803, %s816
        %v818 = vpop.permute.xlu0 %817
        %s820 = sor.u32 256, 32
        %821 = vbcast.lane.b32.xlu0 %v803, %s820
        %v822 = vpop.permute.xlu0 %821
        %s824 = sor.u32 256, 40
        %825 = vbcast.lane.b32.xlu0 %v803, %s824
        %v826 = vpop.permute.xlu0 %825
        %s828 = sor.u32 256, 48
        %829 = vbcast.lane.b32.xlu0 %v803, %s828
        %v830 = vpop.permute.xlu0 %829
        %s832 = sor.u32 256, 56
        %833 = vbcast.lane.b32.xlu0 %v803, %s832
        %v834 = vpop.permute.xlu0 %833
        %v835 = vlaneseq
        %v836 = vshrl.u32 %v835, 7
        %v837 = vsub.s32 2, %v836
        %v838 = vrot.slane %v764, %v837
        %840 = vbcast.lane.b32.xlu0 %v838, 256
        %v841 = vpop.permute.xlu0 %840
        %s843 = sor.u32 256, 8
        %844 = vbcast.lane.b32.xlu0 %v838, %s843
        %v845 = vpop.permute.xlu0 %844
        %s847 = sor.u32 256, 16
        %848 = vbcast.lane.b32.xlu0 %v838, %s847
        %v849 = vpop.permute.xlu0 %848
        %s851 = sor.u32 256, 24
        %852 = vbcast.lane.b32.xlu0 %v838, %s851
        %v853 = vpop.permute.xlu0 %852
        %s855 = sor.u32 256, 32
        %856 = vbcast.lane.b32.xlu0 %v838, %s855
        %v857 = vpop.permute.xlu0 %856
        %s859 = sor.u32 256, 40
        %860 = vbcast.lane.b32.xlu0 %v838, %s859
        %v861 = vpop.permute.xlu0 %860
        %s863 = sor.u32 256, 48
        %864 = vbcast.lane.b32.xlu0 %v838, %s863
        %v865 = vpop.permute.xlu0 %864
        %s867 = sor.u32 256, 56
        %868 = vbcast.lane.b32.xlu0 %v838, %s867
        %v869 = vpop.permute.xlu0 %868
        %v870 = vlaneseq
        %v871 = vshrl.u32 %v870, 7
        %v872 = vsub.s32 3, %v871
        %v873 = vrot.slane %v764, %v872
        %875 = vbcast.lane.b32.xlu0 %v873, 256
        %v876 = vpop.permute.xlu0 %875
        %s878 = sor.u32 256, 8
        %879 = vbcast.lane.b32.xlu0 %v873, %s878
        %v880 = vpop.permute.xlu0 %879
        %s882 = sor.u32 256, 16
        %883 = vbcast.lane.b32.xlu0 %v873, %s882
        %v884 = vpop.permute.xlu0 %883
        %s886 = sor.u32 256, 24
        %887 = vbcast.lane.b32.xlu0 %v873, %s886
        %v888 = vpop.permute.xlu0 %887
        %s890 = sor.u32 256, 32
        %891 = vbcast.lane.b32.xlu0 %v873, %s890
        %v892 = vpop.permute.xlu0 %891
        %s894 = sor.u32 256, 40
        %895 = vbcast.lane.b32.xlu0 %v873, %s894
        %v896 = vpop.permute.xlu0 %895
        %s898 = sor.u32 256, 48
        %899 = vbcast.lane.b32.xlu0 %v873, %s898
        %v900 = vpop.permute.xlu0 %899
        %s902 = sor.u32 256, 56
        %903 = vbcast.lane.b32.xlu0 %v873, %s902
        %v904 = vpop.permute.xlu0 %903
        %v905 = vmul.f32 %v246, %v771
        %v906 = vmul.f32 %v247, %v775
        %v907 = vmul.f32 %v248, %v779
        %v908 = vmul.f32 %v249, %v783
        %v909 = vmul.f32 %v250, %v787
        %v910 = vmul.f32 %v251, %v791
        %v911 = vmul.f32 %v252, %v795
        %v912 = vmul.f32 %v253, %v799
        %v913 = vmul.f32 %v254, %v806
        %v914 = vmul.f32 %v255, %v810
        %v915 = vmul.f32 %v256, %v814
        %v916 = vmul.f32 %v257, %v818
        %v917 = vmul.f32 %v258, %v822
        %v918 = vmul.f32 %v259, %v826
        %v919 = vmul.f32 %v260, %v830
        %v920 = vmul.f32 %v261, %v834
        %v921 = vmul.f32 %v262, %v841
        %v922 = vmul.f32 %v263, %v845
        %v923 = vmul.f32 %v264, %v849
        %v924 = vmul.f32 %v265, %v853
        %v925 = vmul.f32 %v266, %v857
        %v926 = vmul.f32 %v267, %v861
        %v927 = vmul.f32 %v268, %v865
        %v928 = vmul.f32 %v269, %v869
        %v929 = vmul.f32 %v270, %v876
        %v930 = vmul.f32 %v271, %v880
        %v931 = vmul.f32 %v272, %v884
        %v932 = vmul.f32 %v273, %v888
        %v933 = vmul.f32 %v274, %v892
        %v934 = vmul.f32 %v275, %v896
        %v935 = vmul.f32 %v276, %v900
        %v936 = vmul.f32 %v277, %v904
        %937 = vst [vmem:[%s243] sm:$0xff] %v905
        %938 = vst [vmem:[%s243 + $0x8] sm:$0xff] %v906
        %939 = vst [vmem:[%s243 + $0x10] sm:$0xff] %v907
        %940 = vst [vmem:[%s243 + $0x18] sm:$0xff] %v908
        %941 = vst [vmem:[%s243 + $0x20] sm:$0xff] %v909
        %942 = vst [vmem:[%s243 + $0x28] sm:$0xff] %v910
        %943 = vst [vmem:[%s243 + $0x30] sm:$0xff] %v911
        %944 = vst [vmem:[%s243 + $0x38] sm:$0xff] %v912
        %945 = vst [vmem:[%s243 + $0x40] sm:$0xff] %v913
        %946 = vst [vmem:[%s243 + $0x48] sm:$0xff] %v914
        %947 = vst [vmem:[%s243 + $0x50] sm:$0xff] %v915
        %948 = vst [vmem:[%s243 + $0x58] sm:$0xff] %v916
        %949 = vst [vmem:[%s243 + $0x60] sm:$0xff] %v917
        %950 = vst [vmem:[%s243 + $0x68] sm:$0xff] %v918
        %951 = vst [vmem:[%s243 + $0x70] sm:$0xff] %v919
        %952 = vst [vmem:[%s243 + $0x78] sm:$0xff] %v920
        %953 = vst [vmem:[%s243 + $0x80] sm:$0xff] %v921
        %954 = vst [vmem:[%s243 + $0x88] sm:$0xff] %v922
        %955 = vst [vmem:[%s243 + $0x90] sm:$0xff] %v923
        %956 = vst [vmem:[%s243 + $0x98] sm:$0xff] %v924
        %957 = vst [vmem:[%s243 + $0xa0] sm:$0xff] %v925
        %958 = vst [vmem:[%s243 + $0xa8] sm:$0xff] %v926
        %959 = vst [vmem:[%s243 + $0xb0] sm:$0xff] %v927
        %960 = vst [vmem:[%s243 + $0xb8] sm:$0xff] %v928
        %961 = vst [vmem:[%s243 + $0xc0] sm:$0xff] %v929
        %962 = vst [vmem:[%s243 + $0xc8] sm:$0xff] %v930
        %963 = vst [vmem:[%s243 + $0xd0] sm:$0xff] %v931
        %964 = vst [vmem:[%s243 + $0xd8] sm:$0xff] %v932
        %965 = vst [vmem:[%s243 + $0xe0] sm:$0xff] %v933
        %966 = vst [vmem:[%s243 + $0xe8] sm:$0xff] %v934
        %967 = vst [vmem:[%s243 + $0xf0] sm:$0xff] %v935
        %968 = vst [vmem:[%s243 + $0xf8] sm:$0xff] %v936
        %s969 = sand.u32 %s140, 1
        %s970 = scalar_lea.sflag [#allocation4], %s969
        %s971 = sand.u32 %s140, 1
        %s972 = smul.addr %s971, 256
        %s973 = scalar_lea.vmem [#allocation5], %s972
        // Predicated region
        $region45: #{tpu_custom_call.1} parent=39 // pred_check
          %p974 = pneg %p150
        $region46: #{tpu_custom_call.1} parent=39 // pred_check_branch
          %976 = sbr.rel (%p974) target = $region48
        $region47: #{tpu_custom_call.1} parent=39 // pred_region
          %s977 = smul.u32 4, %s22
          %s979 = ssub.s32 4096, 4096
          %980 = vsyncadd %s970, %s979
          %s981 = smul.addr %s977, 8
          %s982 = smul.addr %s981, 128
          %s983 = scalar_lea.hbm %s5, %s982
          %s984 = sshll.u32 %s973, 4
          %s985 = int_to_ptr.vmem [resolvable:$true] %s984
          %990 = dma.vmem_to_hbm [thread:$0]  %s985, 4096, %s983, %s970, 128, 128, 8
        $region48: #{tpu_custom_call.1} parent=39 // pred_fallthru
          _
      $region40: #{tpu_custom_call.1} parent=5 // pred_fallthru
        _
      %p991 = scmp.le.s32.totalorder 2, %s17
      // Predicated region
      $region49: #{tpu_custom_call.1} parent=5 // pred_check
        %p992 = pneg %p991
      $region50: #{tpu_custom_call.1} parent=5 // pred_check_branch
        %994 = sbr.rel (%p992) target = $region52
      $region51: #{tpu_custom_call.1} parent=5 // pred_region
        %s995 = ssub.s32 %s17, 2
        // Predicated region
        $region53: #{tpu_custom_call.1} parent=51 // pred_check
          %p996 = pneg %p156
        $region54: #{tpu_custom_call.1} parent=51 // pred_check_branch
          %998 = sbr.rel (%p996) target = $region56
        $region55: #{tpu_custom_call.1} parent=51 // pred_region
          %s999 = sand.u32 %s141, 1
          %s1000 = scalar_lea.sflag [#allocation4], %s999
          %s1001 = sand.u32 %s141, 1
          %s1002 = smul.addr %s1001, 256
          %s1003 = scalar_lea.vmem [#allocation5], %s1002
          %1004 = dma.done %s1000, 4096
        $region56: #{tpu_custom_call.1} parent=51 // pred_fallthru
          _
      $region52: #{tpu_custom_call.1} parent=5 // pred_fallthru
        _
    $region6: #{tpu_custom_call.1} parent=1 // loop_footer
      %s21 = sadd.s32 1, %s17
    $region7: #{tpu_custom_call.1} parent=1 // loop_footer_branch
      %16 = sbr.rel target = $region3
    $region8: #{tpu_custom_call.1} parent=1 // loop_exit
      _
    %1005 = vsyncpa [#allocation3], 1
    %s1006 = scalar_lea.sflag [#allocation3], 1
    %1007 = vsyncpa %s1006, 1
    %1008 = vsyncpa [#allocation4], 1
    %s1009 = scalar_lea.sflag [#allocation4], 1
    %1010 = vsyncpa %s1009, 1

</llo_original>
